<compile_context>
chip_gen: v7x
topology: tpu7x:2x2x1
jax: 0.10.0
libtpu: 0.0.40
codegen_flags: <defaults>
</compile_context>

<pallas_src>
import functools

import jax
import jax.numpy as jnp
from jax.experimental import pallas as pl
from jax.experimental.pallas import tpu as pltpu

_LANE = 128      # vreg lane width
_SUBLANE = 8     # f32 sublane count


def _round_up(x, m):
    return ((x + m - 1) // m) * m


# --------------------------------------------------------------------------- #
# Kernel
# --------------------------------------------------------------------------- #
def actor_kernel(x_ref, w1_ref, b1_ref, w2_ref, b2_ref, w3_ref, b3_ref,
                 o_ref, *, max_action):
    wdt = w1_ref.dtype               # matmul-input dtype (f32 or bf16)
    x = x_ref[...].astype(wdt)       # no-op when the wrapper already cast it

    # Layer 1: Linear + ReLU  (MXU matmul, f32 accumulation; bias/ReLU in f32)
    h1 = jnp.dot(x, w1_ref[...], preferred_element_type=jnp.float32) + b1_ref[...]
    h1 = jnp.maximum(h1, 0.0)

    # Layer 2: Linear + ReLU
    h2 = jnp.dot(h1.astype(wdt), w2_ref[...],
                 preferred_element_type=jnp.float32) + b2_ref[...]
    h2 = jnp.maximum(h2, 0.0)

    # Layer 3: Linear + Tanh (EUP), scaled by max_action
    out = jnp.dot(h2.astype(wdt), w3_ref[...],
                  preferred_element_type=jnp.float32) + b3_ref[...]
    o_ref[...] = (max_action * jnp.tanh(out)).astype(o_ref.dtype)


# --------------------------------------------------------------------------- #
# One-time parameter preparation (hoisted out of the per-call path)
# --------------------------------------------------------------------------- #
def prepare_params(params, weight_dtype=jnp.float32):
    """Pad the hidden dim to a multiple of 128 and cast weights ONCE.

    Zero-padding is mathematically neutral (padded weight rows/cols and biases
    are zero; ReLU(0)=0), so the padded hidden units contribute nothing.
    The state feature dim and the action dim are left un-padded.
    """
    w1, b1, w2, b2, w3, b3 = (params["w1"], params["b1"], params["w2"],
                              params["b2"], params["w3"], params["b3"])
    S, H = w1.shape
    A = w3.shape[1]
    H_pad = _round_up(H, _LANE)

    def pad2(a, rows, cols):
        return jnp.pad(a, ((0, rows - a.shape[0]), (0, cols - a.shape[1])))

    return {
        "w1": pad2(w1, S, H_pad).astype(weight_dtype),
        "b1": pad2(b1, 1, H_pad).astype(jnp.float32),
        "w2": pad2(w2, H_pad, H_pad).astype(weight_dtype),
        "b2": pad2(b2, 1, H_pad).astype(jnp.float32),
        "w3": pad2(w3, H_pad, A).astype(weight_dtype),
        "b3": pad2(b3, 1, A).astype(jnp.float32),
    }


# --------------------------------------------------------------------------- #
# Forward wrapper
# --------------------------------------------------------------------------- #
def actor_forward(state, prepared, max_action=1.0, *, batch_tile=None,
                  single_buffer_weights=True, interpret=False):
    """TD3 Actor forward.

    state    : (B, state_dim) f32 — any B; batch is padded/sliced internally.
    prepared : output of prepare_params() (padded/cast once, reused per call).

    Wrap in jax.jit at the call site so the (cheap) batch padding fuses.
    """
    w1, b1, w2, b2, w3, b3 = (prepared["w1"], prepared["b1"], prepared["w2"],
                              prepared["b2"], prepared["w3"], prepared["b3"])
    B, S = state.shape
    assert w1.shape[0] == S, "state dim does not match prepared params"
    H_pad = w1.shape[1]
    A = w3.shape[1]
    wdt = w1.dtype

    # ---- batch tiling ------------------------------------------------------
    if batch_tile is None:
        if B <= 64:
            # Tiny (per-env-step) batches: a single grid step.
            batch_tile = _round_up(B, _SUBLANE)
        else:
            # Split into >=2 steps so v7x's two TensorCores both get work
            # ("parallel" axis); large tiles (<=1024 rows) amortize the
            # ~0.35us per-step pipeline overhead on every generation.
            batch_tile = min(1024, _round_up(-(-B // 2), _SUBLANE))
    batch_tile = max(_SUBLANE, (batch_tile // _SUBLANE) * _SUBLANE)
    B_pad = _round_up(B, batch_tile)
    grid = (B_pad // batch_tile,)

    # Batch-pad only along rows; NO feature-dim padding of the state stream.
    xp = jnp.pad(state, ((0, B_pad - B), (0, 0)))
    if wdt != jnp.float32:
        # Cast once in the wrapper (under jit), not per grid step in the kernel.
        xp = xp.astype(wdt)

    # ---- VMEM budget: weights x1 (single-buffered) + IO tiles x2 + interms --
    w_bytes = sum(int(a.size) * a.dtype.itemsize for a in (w1, b1, w2, b2, w3, b3))
    w_bufs = 1 if single_buffer_weights else 2
    io_bytes = 2 * batch_tile * (S * xp.dtype.itemsize + A * state.dtype.itemsize)
    act_bytes = 2 * batch_tile * H_pad * 4            # h1/h2 f32 intermediates
    vmem_limit = int(min(64 << 20, w_bufs * w_bytes + io_bytes + act_bytes + (8 << 20)))

    # ---- cost estimate so XLA can schedule/overlap this small custom call ---
    flops = 2 * B_pad * (S * H_pad + H_pad * H_pad + H_pad * A)
    transcendentals = B_pad * A
    bytes_accessed = (int(xp.size) * xp.dtype.itemsize
                      + B_pad * A * state.dtype.itemsize
                      + w_bytes)
    cost = pl.CostEstimate(flops=flops, transcendentals=transcendentals,
                           bytes_accessed=bytes_accessed)

    # Weights/biases: constant block index -> resident across grid steps;
    # single-buffered (a constant block is only ever DMA'd once).
    def resident(shape):
        pm = pl.Buffered(1) if single_buffer_weights else None
        return pl.BlockSpec(shape, lambda i: (0, 0), pipeline_mode=pm)

    kernel = functools.partial(actor_kernel, max_action=float(max_action))

    out = pl.pallas_call(
        kernel,
        out_shape=jax.ShapeDtypeStruct((B_pad, A), state.dtype),
        grid_spec=pltpu.PrefetchScalarGridSpec(
            num_scalar_prefetch=0,
            grid=grid,
            in_specs=[
                # Last block dim == full array extent (S, un-padded) is legal
                # and keeps the per-step state DMA as small as possible.
                pl.BlockSpec((batch_tile, S), lambda i: (i, 0)),   # state
                resident((S, H_pad)),     # w1
                resident((1, H_pad)),     # b1
                resident((H_pad, H_pad)), # w2
                resident((1, H_pad)),     # b2
                resident((H_pad, A)),     # w3
                resident((1, A)),         # b3
            ],
            # Un-padded output: tiny masked store beats 32x inflated writeback.
            out_specs=pl.BlockSpec((batch_tile, A), lambda i: (i, 0)),
        ),
        compiler_params=pltpu.CompilerParams(
            dimension_semantics=("parallel",),
            vmem_limit_bytes=vmem_limit),
        cost_estimate=cost,
        interpret=interpret,
    )(xp, w1, b1, w2, b2, w3, b3)

    return out[:B]


# --------------------------------------------------------------------------- #
# Helpers: synthetic params + pure-JAX reference
# --------------------------------------------------------------------------- #
def init_actor_params(key, state_dim, action_dim, hidden_dim):
    """Deterministic synthetic parameters (not a checkpoint load)."""
    k1, k2, k3, k4, k5, k6 = jax.random.split(key, 6)
    scale = 0.1
    return {
        "w1": scale * jax.random.normal(k1, (state_dim, hidden_dim), jnp.float32),
        "b1": scale * jax.random.normal(k2, (1, hidden_dim), jnp.float32),
        "w2": scale * jax.random.normal(k3, (hidden_dim, hidden_dim), jnp.float32),
        "b2": scale * jax.random.normal(k4, (1, hidden_dim), jnp.float32),
        "w3": scale * jax.random.normal(k5, (hidden_dim, action_dim), jnp.float32),
        "b3": scale * jax.random.normal(k6, (1, action_dim), jnp.float32),
    }


def actor_forward_ref(state, params, max_action=1.0):
    """Pure-JAX reference for correctness checking."""
    h1 = jnp.maximum(state @ params["w1"] + params["b1"], 0.0)
    h2 = jnp.maximum(h1 @ params["w2"] + params["b2"], 0.0)
    return max_action * jnp.tanh(h2 @ params["w3"] + params["b3"])


# --------------------------------------------------------------------------- #
# Demo / self-test
# --------------------------------------------------------------------------- #
if __name__ == "__main__":
    # Shapes consistent with the PandaPush TD3 actor (module default hidden=256).
    state_dim = 24
    action_dim = 4
    hidden_dim = 256
    max_action = 1.0

    key = jax.random.PRNGKey(0)
    pkey, skey, skey2 = jax.random.split(key, 3)
    params = init_actor_params(pkey, state_dim, action_dim, hidden_dim)

    # Pad/cast the weights ONCE (hoisted out of the per-call path).
    prepared_f32 = jax.tree_util.tree_map(jax.block_until_ready,
                                          prepare_params(params, jnp.float32))

    fwd = jax.jit(functools.partial(actor_forward, max_action=max_action))

    # 1) Tiny per-env-step batch (single grid step).
    batch = 8
    state = jax.random.normal(skey, (batch, state_dim), jnp.float32)
    out = jax.block_until_ready(fwd(state, prepared_f32))
    ref = actor_forward_ref(state, params, max_action)
    assert out.shape == (batch, action_dim)
    assert jnp.allclose(out, ref, atol=1e-4, rtol=1e-4), "mismatch vs reference (B=8)"

    # 2) Larger amortized batch: 2 grid steps of ~504 rows each, exercising
    #    batch padding and the "parallel" axis (both TCs get work on v7x).
    batch2 = 1000
    state2 = jax.random.normal(skey2, (batch2, state_dim), jnp.float32)
    out2 = jax.block_until_ready(fwd(state2, prepared_f32))
    ref2 = actor_forward_ref(state2, params, max_action)
    assert out2.shape == (batch2, action_dim)
    assert jnp.allclose(out2, ref2, atol=1e-4, rtol=1e-4), "mismatch vs reference (B=1000)"

    # 3) bf16 matmul-input path (halves weight DMA/VMEM, feeds the bf16 MXU at
    #    native rate on v6e/v7x); f32 accumulation + f32 element-wise kept.
    prepared_bf16 = prepare_params(params, jnp.bfloat16)
    out3 = jax.block_until_ready(fwd(state2, prepared_bf16))
    assert out3.shape == (batch2, action_dim)
    assert bool(jnp.max(jnp.abs(out3 - ref2)) < 0.1), "bf16 path diverged too far"

    print("KERNEL_OK")
</pallas_src>

<mosaic_0001>
module attributes {stable_mosaic.version = 11 : i64} {
  func.func @actor_kernel(%arg0: i32, %arg1: memref<8x24xf32, #tpu.memory_space<vmem>>, %arg2: memref<24x256xf32, #tpu.memory_space<vmem>>, %arg3: memref<1x256xf32, #tpu.memory_space<vmem>>, %arg4: memref<256x256xf32, #tpu.memory_space<vmem>>, %arg5: memref<1x256xf32, #tpu.memory_space<vmem>>, %arg6: memref<256x4xf32, #tpu.memory_space<vmem>>, %arg7: memref<1x4xf32, #tpu.memory_space<vmem>>, %arg8: memref<8x4xf32, #tpu.memory_space<vmem>>) attributes {dimension_semantics = [#tpu.dimension_semantics<parallel>], iteration_bounds = array<i64: 1>, scalar_prefetch = 0 : i64, scratch_operands = 0 : i64, tpu.core_type = #tpu.core_type<tc>, window_params = [{transform_indices = @transform_0, window_bounds = array<i64: 8, 24>}, {pipeline_mode = #tpu.pipeline_mode<synchronous>, transform_indices = @transform_1, window_bounds = array<i64: 24, 256>}, {pipeline_mode = #tpu.pipeline_mode<synchronous>, transform_indices = @transform_2, window_bounds = array<i64: 1, 256>}, {pipeline_mode = #tpu.pipeline_mode<synchronous>, transform_indices = @transform_3, window_bounds = array<i64: 256, 256>}, {pipeline_mode = #tpu.pipeline_mode<synchronous>, transform_indices = @transform_4, window_bounds = array<i64: 1, 256>}, {pipeline_mode = #tpu.pipeline_mode<synchronous>, transform_indices = @transform_5, window_bounds = array<i64: 256, 4>}, {pipeline_mode = #tpu.pipeline_mode<synchronous>, transform_indices = @transform_6, window_bounds = array<i64: 1, 4>}, {transform_indices = @transform_7, window_bounds = array<i64: 8, 4>}]} {
    %c0 = arith.constant 0 : index
    %c0_0 = arith.constant 0 : index
    %0 = vector.load %arg1[%c0, %c0_0] : memref<8x24xf32, #tpu.memory_space<vmem>>, vector<8x24xf32>
    %c0_1 = arith.constant 0 : index
    %c0_2 = arith.constant 0 : index
    %1 = vector.load %arg2[%c0_1, %c0_2] : memref<24x256xf32, #tpu.memory_space<vmem>>, vector<24x256xf32>
    %cst = arith.constant dense<0.000000e+00> : vector<8x256xf32>
    %2 = tpu.matmul %0, %1, %cst {dimension_numbers = #tpu.dot_dimension_numbers<[1], [0], [0], [1], [0, 0, 1, 1], [], []>} : vector<8x24xf32>, vector<24x256xf32>, vector<8x256xf32> -> vector<8x256xf32>
    %c0_3 = arith.constant 0 : index
    %c0_4 = arith.constant 0 : index
    %3 = vector.load %arg3[%c0_3, %c0_4] : memref<1x256xf32, #tpu.memory_space<vmem>>, vector<1x256xf32>
    %4 = vector.broadcast %3 : vector<1x256xf32> to vector<8x256xf32>
    %5 = arith.addf %2, %4 : vector<8x256xf32>
    %cst_5 = arith.constant 0.000000e+00 : f32
    %6 = vector.broadcast %cst_5 : f32 to vector<8x256xf32>
    %7 = arith.maximumf %5, %6 : vector<8x256xf32>
    %c0_6 = arith.constant 0 : index
    %c0_7 = arith.constant 0 : index
    %8 = vector.load %arg4[%c0_6, %c0_7] : memref<256x256xf32, #tpu.memory_space<vmem>>, vector<256x256xf32>
    %cst_8 = arith.constant dense<0.000000e+00> : vector<8x256xf32>
    %9 = tpu.matmul %7, %8, %cst_8 {dimension_numbers = #tpu.dot_dimension_numbers<[1], [0], [0], [1], [0, 0, 1, 1], [], []>} : vector<8x256xf32>, vector<256x256xf32>, vector<8x256xf32> -> vector<8x256xf32>
    %c0_9 = arith.constant 0 : index
    %c0_10 = arith.constant 0 : index
    %10 = vector.load %arg5[%c0_9, %c0_10] : memref<1x256xf32, #tpu.memory_space<vmem>>, vector<1x256xf32>
    %11 = vector.broadcast %10 : vector<1x256xf32> to vector<8x256xf32>
    %12 = arith.addf %9, %11 : vector<8x256xf32>
    %cst_11 = arith.constant 0.000000e+00 : f32
    %13 = vector.broadcast %cst_11 : f32 to vector<8x256xf32>
    %14 = arith.maximumf %12, %13 : vector<8x256xf32>
    %c0_12 = arith.constant 0 : index
    %c0_13 = arith.constant 0 : index
    %15 = vector.load %arg6[%c0_12, %c0_13] : memref<256x4xf32, #tpu.memory_space<vmem>>, vector<256x4xf32>
    %cst_14 = arith.constant dense<0.000000e+00> : vector<8x4xf32>
    %16 = tpu.matmul %14, %15, %cst_14 {dimension_numbers = #tpu.dot_dimension_numbers<[1], [0], [0], [1], [0, 0, 1, 1], [], []>} : vector<8x256xf32>, vector<256x4xf32>, vector<8x4xf32> -> vector<8x4xf32>
    %c0_15 = arith.constant 0 : index
    %c0_16 = arith.constant 0 : index
    %17 = vector.load %arg7[%c0_15, %c0_16] : memref<1x4xf32, #tpu.memory_space<vmem>>, vector<1x4xf32>
    %18 = vector.broadcast %17 : vector<1x4xf32> to vector<8x4xf32>
    %19 = arith.addf %16, %18 : vector<8x4xf32>
    %20 = math.tanh %19 : vector<8x4xf32>
    %cst_17 = arith.constant 1.000000e+00 : f32
    %21 = vector.broadcast %cst_17 : f32 to vector<8x4xf32>
    %22 = arith.mulf %21, %20 : vector<8x4xf32>
    %c0_18 = arith.constant 0 : index
    %c0_19 = arith.constant 0 : index
    %23 = vector.load %arg8[%c0_18, %c0_19] : memref<8x4xf32, #tpu.memory_space<vmem>>, vector<8x4xf32>
    tpu.vector_store %arg8[%c0_18, %c0_19], %22 {strides = array<i32>} : memref<8x4xf32, #tpu.memory_space<vmem>>, vector<8x4xf32>,
    return
  }
  func.func @transform_0(%arg0: i32) -> (i32, i32) {
    %c0_i32 = arith.constant 0 : i32
    %c0_i32_0 = arith.constant 0 : i32
    return %arg0, %c0_i32 : i32, i32
  }
  func.func @transform_1(%arg0: i32) -> (i32, i32) {
    %c0_i32 = arith.constant 0 : i32
    %c0_i32_0 = arith.constant 0 : i32
    %c0_i32_1 = arith.constant 0 : i32
    return %c0_i32, %c0_i32_0 : i32, i32
  }
  func.func @transform_2(%arg0: i32) -> (i32, i32) {
    %c0_i32 = arith.constant 0 : i32
    %c0_i32_0 = arith.constant 0 : i32
    %c0_i32_1 = arith.constant 0 : i32
    return %c0_i32, %c0_i32_0 : i32, i32
  }
  func.func @transform_3(%arg0: i32) -> (i32, i32) {
    %c0_i32 = arith.constant 0 : i32
    %c0_i32_0 = arith.constant 0 : i32
    %c0_i32_1 = arith.constant 0 : i32
    return %c0_i32, %c0_i32_0 : i32, i32
  }
  func.func @transform_4(%arg0: i32) -> (i32, i32) {
    %c0_i32 = arith.constant 0 : i32
    %c0_i32_0 = arith.constant 0 : i32
    %c0_i32_1 = arith.constant 0 : i32
    return %c0_i32, %c0_i32_0 : i32, i32
  }
  func.func @transform_5(%arg0: i32) -> (i32, i32) {
    %c0_i32 = arith.constant 0 : i32
    %c0_i32_0 = arith.constant 0 : i32
    %c0_i32_1 = arith.constant 0 : i32
    return %c0_i32, %c0_i32_0 : i32, i32
  }
  func.func @transform_6(%arg0: i32) -> (i32, i32) {
    %c0_i32 = arith.constant 0 : i32
    %c0_i32_0 = arith.constant 0 : i32
    %c0_i32_1 = arith.constant 0 : i32
    return %c0_i32, %c0_i32_0 : i32, i32
  }
  func.func @transform_7(%arg0: i32) -> (i32, i32) {
    %c0_i32 = arith.constant 0 : i32
    %c0_i32_0 = arith.constant 0 : i32
    return %arg0, %c0_i32 : i32, i32
  }
}

</mosaic_0001>

<llo_original>
// kernel: actor_forward.1
$region0: #{actor_forward.1}
  #allocation0 [shape = 'u32[]', space=smem, size = 0x4, offset = 0x4, fixed_abs, tag = 'smem constant byte address 0x4 - core index']
  #allocation1 [shape = 'u32[144,128]{1,0:T(1,128)}', space=vmem, size = 0x12000, scoped, tag = 'internal scratch']
  %s0 = inlined_call_operand.vmem [shape: f32[8,24], index: 0, kind: input, shape index: {}]
  %s1 = inlined_call_operand.vmem [shape: f32[24,256], index: 1, kind: input, shape index: {}]
  %s2 = inlined_call_operand.vmem [shape: f32[1,256], index: 2, kind: input, shape index: {}]
  %s3 = inlined_call_operand.hbm [shape: f32[256,256], index: 3, kind: input, shape index: {}]
  %s4 = inlined_call_operand.vmem [shape: f32[1,256], index: 4, kind: input, shape index: {}]
  %s5 = inlined_call_operand.vmem [shape: f32[256,4], index: 5, kind: input, shape index: {}]
  %s6 = inlined_call_operand.vmem [shape: f32[1,4], index: 6, kind: input, shape index: {}]
  %s7 = inlined_call_operand.vmem [shape: f32[8,4], index: 7, kind: output, shape index: {}]
  %s8 = sld [smem:[#allocation0]]
  $region42: #{actor_forward.1} parent=0
    _
  %s10 = ssub.s32 1, %s8
  %s11 = scalar_select 0, %s10, %s8
  $region1: #{actor_forward.1} parent=0
    #allocation2 [shape = 'u8[262144]{0}', space=vmem, size = 0x40000, scoped, tag = 'input window, operand 3, single buffered']
    #allocation3 [shape = 's32[1]{0}', space=sflag, size = 0x4, scoped, tag = 'scoped memory for actor_forward.1']
    %12 = vsyncpa [#allocation3], 0
    // Predicated region
    $region2: #{actor_forward.1} parent=1 // pred_check
      _
    $region3: #{actor_forward.1} parent=1 // pred_check_branch
      %14 = sbr.rel (0) target = $region5
    $region4: #{actor_forward.1} parent=1 // pred_region
      _
    $region5: #{actor_forward.1} parent=1 // pred_fallthru
      _
    // Predicated region
    $region6: #{actor_forward.1} parent=1 // pred_check
      _
    $region7: #{actor_forward.1} parent=1 // pred_check_branch
      %16 = sbr.rel (0) target = $region9
    $region8: #{actor_forward.1} parent=1 // pred_region
      _
    $region9: #{actor_forward.1} parent=1 // pred_fallthru
      _
    // Predicated region
    $region10: #{actor_forward.1} parent=1 // pred_check
      _
    $region11: #{actor_forward.1} parent=1 // pred_check_branch
      %18 = sbr.rel (0) target = $region13
    $region12: #{actor_forward.1} parent=1 // pred_region
      _
    $region13: #{actor_forward.1} parent=1 // pred_fallthru
      _
    // Predicated region
    $region14: #{actor_forward.1} parent=1 // pred_check
      _
    $region15: #{actor_forward.1} parent=1 // pred_check_branch
      %20 = sbr.rel (0) target = $region17
    $region16: #{actor_forward.1} parent=1 // pred_region
      %s22 = ssub.s32 8192, 8192
      %23 = vsyncadd [#allocation3], %s22
      %s24 = sshll.u32 [#allocation2], 4
      %s25 = int_to_ptr.vmem [resolvable:$true] %s24
      %30 = dma.hbm_to_vmem [thread:$0]  %s3, 8192, %s25, [#allocation3], 256, 256, 16
    $region17: #{actor_forward.1} parent=1 // pred_fallthru
      _
    // Predicated region
    $region18: #{actor_forward.1} parent=1 // pred_check
      _
    $region19: #{actor_forward.1} parent=1 // pred_check_branch
      %32 = sbr.rel (0) target = $region21
    $region20: #{actor_forward.1} parent=1 // pred_region
      _
    $region21: #{actor_forward.1} parent=1 // pred_fallthru
      _
    // Predicated region
    $region22: #{actor_forward.1} parent=1 // pred_check
      _
    $region23: #{actor_forward.1} parent=1 // pred_check_branch
      %34 = sbr.rel (0) target = $region25
    $region24: #{actor_forward.1} parent=1 // pred_region
      _
    $region25: #{actor_forward.1} parent=1 // pred_fallthru
      _
    // Predicated region
    $region26: #{actor_forward.1} parent=1 // pred_check
      _
    $region27: #{actor_forward.1} parent=1 // pred_check_branch
      %36 = sbr.rel (0) target = $region29
    $region28: #{actor_forward.1} parent=1 // pred_region
      _
    $region29: #{actor_forward.1} parent=1 // pred_fallthru
      _
    // Predicated region
    $region30: #{actor_forward.1} parent=1 // pred_check
      _
    $region31: #{actor_forward.1} parent=1 // pred_check_branch
      %38 = sbr.rel (0) target = $region33
    $region32: #{actor_forward.1} parent=1 // pred_region
      %39 = dma.done [#allocation3], 8192
    $region33: #{actor_forward.1} parent=1 // pred_fallthru
      _
    %v40 = vld [vmem:[%s0] sm:$0xff]
    %v41 = vld [vmem:[%s1] sm:$0xff]
    %v42 = vld [vmem:[%s1 + $0x8] sm:$0xff]
    %v43 = vld [vmem:[%s1 + $0x10] sm:$0xff]
    %v44 = vld [vmem:[%s1 + $0x18] sm:$0xff]
    %v45 = vld [vmem:[%s1 + $0x20] sm:$0xff]
    %v46 = vld [vmem:[%s1 + $0x28] sm:$0xff]
    %v47 = vld [vmem:[%s2] sm:$0x3]
    %v49 = vlaneseq
    %v50 = vshrl.u32 %v49, 7
    %v51 = vsub.s32 0, %v50
    %v52 = vrot.slane %v47, %v51
    %v53 = vlaneseq
    %v54 = vshrl.u32 %v53, 7
    %v55 = vsub.s32 1, %v54
    %v56 = vrot.slane %v47, %v55
    %vm59 = vcmask 195584
    %v61 = vsel %vm59, %v40, 0
    %63 = vmatprep.subr.mxu0 %v42
    %64 = vmatpush1.msra.mxu0 %v41
    %65 = vmatprep.subr.mxu0 %v44
    %66 = vmatpush1.msra.mxu0 %v43
    %67 = vmatprep.subr.mxu0 %v46
    %68 = vmatpush1.msra.mxu0 %v45
    %69 = vmatprep.subr.mxu0 0.0
    %70 = vmatpush1.msra.mxu0 0.0
    %71 = vmatprep.subr.mxu0 0.0
    %72 = vmatpush1.msra.mxu0 0.0
    %73 = vmatprep.subr.mxu0 0.0
    %74 = vmatpush1.msra.mxu0 0.0
    %75 = vmatprep.subr.mxu0 0.0
    %76 = vmatpush1.msra.mxu0 0.0
    %77 = vmatprep.subr.mxu0 0.0
    %78 = vmatpush1.msra.mxu0 0.0
    %79 = vmatprep.subr.mxu0 0.0
    %80 = vmatpush1.msra.mxu0 0.0
    %81 = vmatprep.subr.mxu0 0.0
    %82 = vmatpush1.msra.mxu0 0.0
    %83 = vmatprep.subr.mxu0 0.0
    %84 = vmatpush1.msra.mxu0 0.0
    %85 = vmatprep.subr.mxu0 0.0
    %86 = vmatpush1.msra.mxu0 0.0
    %87 = vmatprep.subr.mxu0 0.0
    %88 = vmatpush1.msra.mxu0 0.0
    %89 = vmatprep.subr.mxu0 0.0
    %90 = vmatpush1.msra.mxu0 0.0
    %91 = vmatprep.subr.mxu0 0.0
    %92 = vmatpush1.msra.mxu0 0.0
    %93 = vmatprep.subr.mxu0 0.0
    %94 = vmatpush1.msra.mxu0 0.0
    %95 = vmatprep.subr.mxu0 0.0
    %96 = vmatpush1.msra.mxu0 0.0
    %97 = vmatprep.subr.mxu0 0.0
    %98 = vmatpush1.msra.mxu0 0.0
    %99 = vmatprep.subr.mxu0 0.0
    %100 = vmatpush1.msra.mxu0 0.0
    %101 = vmatprep.subr.mxu0 0.0
    %102 = vmatpush1.msra.mxu0 0.0
    %103 = vmatprep.subr.mxu0 0.0
    %104 = vmatpush1.msra.mxu0 0.0
    %105 = vmatprep.subr.mxu0 0.0
    %106 = vmatpush1.msra.mxu0 0.0
    %107 = vmatprep.subr.mxu0 0.0
    %108 = vmatpush1.msra.mxu0 0.0
    %109 = vmatprep.subr.mxu0 0.0
    %110 = vmatpush1.msra.mxu0 0.0
    %111 = vmatprep.subr.mxu0 0.0
    %112 = vmatpush1.msra.mxu0 0.0
    %113 = vmatprep.subr.mxu0 0.0
    %114 = vmatpush1.msra.mxu0 0.0
    %115 = vmatprep.subr.mxu0 0.0
    %116 = vmatpush1.msra.mxu0 0.0
    %117 = vmatprep.subr.mxu0 0.0
    %118 = vmatpush1.msra.mxu0 0.0
    %119 = vmatprep.subr.mxu0 0.0
    %120 = vmatpush1.msra.mxu0 0.0
    %121 = vmatprep.subr.mxu0 0.0
    %122 = vmatpush1.msra.mxu0 0.0
    %123 = vmatprep.subr.mxu0 0.0
    %124 = vmatpush1.msra.mxu0 0.0
    %125 = vmatprep.subr.mxu0 0.0
    %126 = vmatpush1.msra.mxu0 0.0
    %127 = vmatprep.mubr.f32.mxu0 0.0
    %128 = vmatmul.mubr.f32.gmra.mrb[0].mxu0 %v61
    %v129 = vpop.f32.mrb[0].mxu0
    %v130 = vadd.f32 %v52, %v129
    %v131 = vpop.f32.mrb[0].mxu0
    %v132 = vadd.f32 %v56, %v131
    %133 = vdwg.mxu0
    %v134 = vmax.f32 %v130, 0.0
    %v135 = vmax.f32 %v132, 0.0
    %v136 = vld [vmem:[#allocation2] sm:$0xff]
    %v137 = vld [vmem:[#allocation2 + $0x8] sm:$0xff]
    %v138 = vld [vmem:[#allocation2 + $0x10] sm:$0xff]
    %v139 = vld [vmem:[#allocation2 + $0x18] sm:$0xff]
    %v140 = vld [vmem:[#allocation2 + $0x20] sm:$0xff]
    %v141 = vld [vmem:[#allocation2 + $0x28] sm:$0xff]
    %v142 = vld [vmem:[#allocation2 + $0x30] sm:$0xff]
    %v143 = vld [vmem:[#allocation2 + $0x38] sm:$0xff]
    %v144 = vld [vmem:[#allocation2 + $0x40] sm:$0xff]
    %v145 = vld [vmem:[#allocation2 + $0x48] sm:$0xff]
    %v146 = vld [vmem:[#allocation2 + $0x50] sm:$0xff]
    %v147 = vld [vmem:[#allocation2 + $0x58] sm:$0xff]
    %v148 = vld [vmem:[#allocation2 + $0x60] sm:$0xff]
    %v149 = vld [vmem:[#allocation2 + $0x68] sm:$0xff]
    %v150 = vld [vmem:[#allocation2 + $0x70] sm:$0xff]
    %v151 = vld [vmem:[#allocation2 + $0x78] sm:$0xff]
    %v152 = vld [vmem:[#allocation2 + $0x80] sm:$0xff]
    %v153 = vld [vmem:[#allocation2 + $0x88] sm:$0xff]
    %v154 = vld [vmem:[#allocation2 + $0x90] sm:$0xff]
    %v155 = vld [vmem:[#allocation2 + $0x98] sm:$0xff]
    %v156 = vld [vmem:[#allocation2 + $0xa0] sm:$0xff]
    %v157 = vld [vmem:[#allocation2 + $0xa8] sm:$0xff]
    %v158 = vld [vmem:[#allocation2 + $0xb0] sm:$0xff]
    %v159 = vld [vmem:[#allocation2 + $0xb8] sm:$0xff]
    %v160 = vld [vmem:[#allocation2 + $0xc0] sm:$0xff]
    %v161 = vld [vmem:[#allocation2 + $0xc8] sm:$0xff]
    %v162 = vld [vmem:[#allocation2 + $0xd0] sm:$0xff]
    %v163 = vld [vmem:[#allocation2 + $0xd8] sm:$0xff]
    %v164 = vld [vmem:[#allocation2 + $0xe0] sm:$0xff]
    %v165 = vld [vmem:[#allocation2 + $0xe8] sm:$0xff]
    %v166 = vld [vmem:[#allocation2 + $0xf0] sm:$0xff]
    %v167 = vld [vmem:[#allocation2 + $0xf8] sm:$0xff]
    %v168 = vld [vmem:[#allocation2 + $0x100] sm:$0xff]
    %v169 = vld [vmem:[#allocation2 + $0x108] sm:$0xff]
    %v170 = vld [vmem:[#allocation2 + $0x110] sm:$0xff]
    %v171 = vld [vmem:[#allocation2 + $0x118] sm:$0xff]
    %v172 = vld [vmem:[#allocation2 + $0x120] sm:$0xff]
    %v173 = vld [vmem:[#allocation2 + $0x128] sm:$0xff]
    %v174 = vld [vmem:[#allocation2 + $0x130] sm:$0xff]
    %v175 = vld [vmem:[#allocation2 + $0x138] sm:$0xff]
    %v176 = vld [vmem:[#allocation2 + $0x140] sm:$0xff]
    %v177 = vld [vmem:[#allocation2 + $0x148] sm:$0xff]
    %v178 = vld [vmem:[#allocation2 + $0x150] sm:$0xff]
    %v179 = vld [vmem:[#allocation2 + $0x158] sm:$0xff]
    %v180 = vld [vmem:[#allocation2 + $0x160] sm:$0xff]
    %v181 = vld [vmem:[#allocation2 + $0x168] sm:$0xff]
    %v182 = vld [vmem:[#allocation2 + $0x170] sm:$0xff]
    %v183 = vld [vmem:[#allocation2 + $0x178] sm:$0xff]
    %v184 = vld [vmem:[#allocation2 + $0x180] sm:$0xff]
    %v185 = vld [vmem:[#allocation2 + $0x188] sm:$0xff]
    %v186 = vld [vmem:[#allocation2 + $0x190] sm:$0xff]
    %v187 = vld [vmem:[#allocation2 + $0x198] sm:$0xff]
    %v188 = vld [vmem:[#allocation2 + $0x1a0] sm:$0xff]
    %v189 = vld [vmem:[#allocation2 + $0x1a8] sm:$0xff]
    %v190 = vld [vmem:[#allocation2 + $0x1b0] sm:$0xff]
    %v191 = vld [vmem:[#allocation2 + $0x1b8] sm:$0xff]
    %v192 = vld [vmem:[#allocation2 + $0x1c0] sm:$0xff]
    %v193 = vld [vmem:[#allocation2 + $0x1c8] sm:$0xff]
    %v194 = vld [vmem:[#allocation2 + $0x1d0] sm:$0xff]
    %v195 = vld [vmem:[#allocation2 + $0x1d8] sm:$0xff]
    %v196 = vld [vmem:[#allocation2 + $0x1e0] sm:$0xff]
    %v197 = vld [vmem:[#allocation2 + $0x1e8] sm:$0xff]
    %v198 = vld [vmem:[#allocation2 + $0x1f0] sm:$0xff]
    %v199 = vld [vmem:[#allocation2 + $0x1f8] sm:$0xff]
    %v200 = vld [vmem:[%s4] sm:$0x3]
    %v202 = vlaneseq
    %v203 = vshrl.u32 %v202, 7
    %v204 = vsub.s32 0, %v203
    %v205 = vrot.slane %v200, %v204
    %v206 = vlaneseq
    %v207 = vshrl.u32 %v206, 7
    %v208 = vsub.s32 1, %v207
    %v209 = vrot.slane %v200, %v208
    %212 = vmatprep.subr.mxu0 %v137
    %213 = vmatpush1.msra.mxu0 %v136
    %214 = vmatprep.subr.mxu0 %v139
    %215 = vmatpush1.msra.mxu0 %v138
    %216 = vmatprep.subr.mxu0 %v141
    %217 = vmatpush1.msra.mxu0 %v140
    %218 = vmatprep.subr.mxu0 %v143
    %219 = vmatpush1.msra.mxu0 %v142
    %220 = vmatprep.subr.mxu0 %v145
    %221 = vmatpush1.msra.mxu0 %v144
    %222 = vmatprep.subr.mxu0 %v147
    %223 = vmatpush1.msra.mxu0 %v146
    %224 = vmatprep.subr.mxu0 %v149
    %225 = vmatpush1.msra.mxu0 %v148
    %226 = vmatprep.subr.mxu0 %v151
    %227 = vmatpush1.msra.mxu0 %v150
    %228 = vmatprep.subr.mxu0 %v153
    %229 = vmatpush1.msra.mxu0 %v152
    %230 = vmatprep.subr.mxu0 %v155
    %231 = vmatpush1.msra.mxu0 %v154
    %232 = vmatprep.subr.mxu0 %v157
    %233 = vmatpush1.msra.mxu0 %v156
    %234 = vmatprep.subr.mxu0 %v159
    %235 = vmatpush1.msra.mxu0 %v158
    %236 = vmatprep.subr.mxu0 %v161
    %237 = vmatpush1.msra.mxu0 %v160
    %238 = vmatprep.subr.mxu0 %v163
    %239 = vmatpush1.msra.mxu0 %v162
    %240 = vmatprep.subr.mxu0 %v165
    %241 = vmatpush1.msra.mxu0 %v164
    %242 = vmatprep.subr.mxu0 %v167
    %243 = vmatpush1.msra.mxu0 %v166
    %244 = vmatprep.subr.mxu0 %v169
    %245 = vmatpush1.msra.mxu0 %v168
    %246 = vmatprep.subr.mxu0 %v171
    %247 = vmatpush1.msra.mxu0 %v170
    %248 = vmatprep.subr.mxu0 %v173
    %249 = vmatpush1.msra.mxu0 %v172
    %250 = vmatprep.subr.mxu0 %v175
    %251 = vmatpush1.msra.mxu0 %v174
    %252 = vmatprep.subr.mxu0 %v177
    %253 = vmatpush1.msra.mxu0 %v176
    %254 = vmatprep.subr.mxu0 %v179
    %255 = vmatpush1.msra.mxu0 %v178
    %256 = vmatprep.subr.mxu0 %v181
    %257 = vmatpush1.msra.mxu0 %v180
    %258 = vmatprep.subr.mxu0 %v183
    %259 = vmatpush1.msra.mxu0 %v182
    %260 = vmatprep.subr.mxu0 %v185
    %261 = vmatpush1.msra.mxu0 %v184
    %262 = vmatprep.subr.mxu0 %v187
    %263 = vmatpush1.msra.mxu0 %v186
    %264 = vmatprep.subr.mxu0 %v189
    %265 = vmatpush1.msra.mxu0 %v188
    %266 = vmatprep.subr.mxu0 %v191
    %267 = vmatpush1.msra.mxu0 %v190
    %268 = vmatprep.subr.mxu0 %v193
    %269 = vmatpush1.msra.mxu0 %v192
    %270 = vmatprep.subr.mxu0 %v195
    %271 = vmatpush1.msra.mxu0 %v194
    %272 = vmatprep.subr.mxu0 %v197
    %273 = vmatpush1.msra.mxu0 %v196
    %274 = vmatprep.subr.mxu0 %v199
    %275 = vmatpush1.msra.mxu0 %v198
    %276 = vmatprep.mubr.f32.mxu0 %v135
    %277 = vmatmul.mubr.f32.gmra.mrb[0].mxu0 %v134
    %v278 = vpop.f32.mrb[0].mxu0
    %v279 = vadd.f32 %v205, %v278
    %v280 = vpop.f32.mrb[0].mxu0
    %v281 = vadd.f32 %v209, %v280
    %282 = vdwg.mxu0
    %v283 = vmax.f32 %v279, 0.0
    %v284 = vmax.f32 %v281, 0.0
    %v285 = vld [vmem:[%s5] sm:$0xff]
    %v286 = vld [vmem:[%s5 + $0x8] sm:$0xff]
    %v287 = vld [vmem:[%s5 + $0x10] sm:$0xff]
    %v288 = vld [vmem:[%s5 + $0x18] sm:$0xff]
    %v289 = vld [vmem:[%s5 + $0x20] sm:$0xff]
    %v290 = vld [vmem:[%s5 + $0x28] sm:$0xff]
    %v291 = vld [vmem:[%s5 + $0x30] sm:$0xff]
    %v292 = vld [vmem:[%s5 + $0x38] sm:$0xff]
    %v293 = vld [vmem:[%s5 + $0x40] sm:$0xff]
    %v294 = vld [vmem:[%s5 + $0x48] sm:$0xff]
    %v295 = vld [vmem:[%s5 + $0x50] sm:$0xff]
    %v296 = vld [vmem:[%s5 + $0x58] sm:$0xff]
    %v297 = vld [vmem:[%s5 + $0x60] sm:$0xff]
    %v298 = vld [vmem:[%s5 + $0x68] sm:$0xff]
    %v299 = vld [vmem:[%s5 + $0x70] sm:$0xff]
    %v300 = vld [vmem:[%s5 + $0x78] sm:$0xff]
    %v301 = vld [vmem:[%s5 + $0x80] sm:$0xff]
    %v302 = vld [vmem:[%s5 + $0x88] sm:$0xff]
    %v303 = vld [vmem:[%s5 + $0x90] sm:$0xff]
    %v304 = vld [vmem:[%s5 + $0x98] sm:$0xff]
    %v305 = vld [vmem:[%s5 + $0xa0] sm:$0xff]
    %v306 = vld [vmem:[%s5 + $0xa8] sm:$0xff]
    %v307 = vld [vmem:[%s5 + $0xb0] sm:$0xff]
    %v308 = vld [vmem:[%s5 + $0xb8] sm:$0xff]
    %v309 = vld [vmem:[%s5 + $0xc0] sm:$0xff]
    %v310 = vld [vmem:[%s5 + $0xc8] sm:$0xff]
    %v311 = vld [vmem:[%s5 + $0xd0] sm:$0xff]
    %v312 = vld [vmem:[%s5 + $0xd8] sm:$0xff]
    %v313 = vld [vmem:[%s5 + $0xe0] sm:$0xff]
    %v314 = vld [vmem:[%s5 + $0xe8] sm:$0xff]
    %v315 = vld [vmem:[%s5 + $0xf0] sm:$0xff]
    %v316 = vld [vmem:[%s5 + $0xf8] sm:$0xff]
    %v317 = vld [vmem:[%s6] sm:$0x1]
    %v319 = vlaneseq
    %v320 = vshrl.u32 %v319, 7
    %v321 = vsub.s32 0, %v320
    %v322 = vrot.slane %v317, %v321
    %324 = vmatprep.subr.mxu0 0.0
    %325 = vmatpush1.msra.mxu0 %v285
    %326 = vmatprep.subr.mxu0 0.0
    %327 = vmatpush1.msra.mxu0 %v286
    %328 = vmatprep.subr.mxu0 0.0
    %329 = vmatpush1.msra.mxu0 %v287
    %330 = vmatprep.subr.mxu0 0.0
    %331 = vmatpush1.msra.mxu0 %v288
    %332 = vmatprep.subr.mxu0 0.0
    %333 = vmatpush1.msra.mxu0 %v289
    %334 = vmatprep.subr.mxu0 0.0
    %335 = vmatpush1.msra.mxu0 %v290
    %336 = vmatprep.subr.mxu0 0.0
    %337 = vmatpush1.msra.mxu0 %v291
    %338 = vmatprep.subr.mxu0 0.0
    %339 = vmatpush1.msra.mxu0 %v292
    %340 = vmatprep.subr.mxu0 0.0
    %341 = vmatpush1.msra.mxu0 %v293
    %342 = vmatprep.subr.mxu0 0.0
    %343 = vmatpush1.msra.mxu0 %v294
    %344 = vmatprep.subr.mxu0 0.0
    %345 = vmatpush1.msra.mxu0 %v295
    %346 = vmatprep.subr.mxu0 0.0
    %347 = vmatpush1.msra.mxu0 %v296
    %348 = vmatprep.subr.mxu0 0.0
    %349 = vmatpush1.msra.mxu0 %v297
    %350 = vmatprep.subr.mxu0 0.0
    %351 = vmatpush1.msra.mxu0 %v298
    %352 = vmatprep.subr.mxu0 0.0
    %353 = vmatpush1.msra.mxu0 %v299
    %354 = vmatprep.subr.mxu0 0.0
    %355 = vmatpush1.msra.mxu0 %v300
    %356 = vmatprep.subr.mxu0 0.0
    %357 = vmatpush1.msra.mxu0 %v301
    %358 = vmatprep.subr.mxu0 0.0
    %359 = vmatpush1.msra.mxu0 %v302
    %360 = vmatprep.subr.mxu0 0.0
    %361 = vmatpush1.msra.mxu0 %v303
    %362 = vmatprep.subr.mxu0 0.0
    %363 = vmatpush1.msra.mxu0 %v304
    %364 = vmatprep.subr.mxu0 0.0
    %365 = vmatpush1.msra.mxu0 %v305
    %366 = vmatprep.subr.mxu0 0.0
    %367 = vmatpush1.msra.mxu0 %v306
    %368 = vmatprep.subr.mxu0 0.0
    %369 = vmatpush1.msra.mxu0 %v307
    %370 = vmatprep.subr.mxu0 0.0
    %371 = vmatpush1.msra.mxu0 %v308
    %372 = vmatprep.subr.mxu0 0.0
    %373 = vmatpush1.msra.mxu0 %v309
    %374 = vmatprep.subr.mxu0 0.0
    %375 = vmatpush1.msra.mxu0 %v310
    %376 = vmatprep.subr.mxu0 0.0
    %377 = vmatpush1.msra.mxu0 %v311
    %378 = vmatprep.subr.mxu0 0.0
    %379 = vmatpush1.msra.mxu0 %v312
    %380 = vmatprep.subr.mxu0 0.0
    %381 = vmatpush1.msra.mxu0 %v313
    %382 = vmatprep.subr.mxu0 0.0
    %383 = vmatpush1.msra.mxu0 %v314
    %384 = vmatprep.subr.mxu0 0.0
    %385 = vmatpush1.msra.mxu0 %v315
    %386 = vmatprep.subr.mxu0 0.0
    %387 = vmatpush1.msra.mxu0 %v316
    %388 = vmatprep.mubr.f32.mxu0 %v284
    %389 = vmatmul.mubr.f32.gmra.mrb[0].mxu0 %v283
    %v390 = vpop.f32.mrb[0].mxu0
    %v391 = vadd.f32 %v322, %v390
    %v392 = vpop.f32.mrb[0].mxu0
    %393 = vdwg.mxu0
    %v394 = vtanh.pop %v391
    %vm395 = vcmask 31744
    %396 = vst.msk [vmem:[%s7] sm:$0xff] %vm395, %v394
    // Predicated region
    $region34: #{actor_forward.1} parent=1 // pred_check
      _
    $region35: #{actor_forward.1} parent=1 // pred_check_branch
      %398 = sbr.rel (0) target = $region37
    $region36: #{actor_forward.1} parent=1 // pred_region
      _
    $region37: #{actor_forward.1} parent=1 // pred_fallthru
      _
    // Predicated region
    $region38: #{actor_forward.1} parent=1 // pred_check
      _
    $region39: #{actor_forward.1} parent=1 // pred_check_branch
      %400 = sbr.rel (0) target = $region41
    $region40: #{actor_forward.1} parent=1 // pred_region
      _
    $region41: #{actor_forward.1} parent=1 // pred_fallthru
      _
    %401 = vsyncpa [#allocation3], 1

</llo_original>
